<compile_context>
chip_gen: v6e
topology: v6e:2x2x1
jax: 0.10.0
libtpu: 0.0.40
codegen_flags: <defaults>
</compile_context>

<pallas_src>
import functools

import jax
import jax.numpy as jnp
from jax.experimental import pallas as pl
from jax.experimental.pallas import tpu as pltpu

EPS = 1e-5
_LANES = 128
_ROW_ALIGN = 32                    # multiple of f32 (8,128) / bf16 (16,128) / int8 (32,128)
_TARGET_BLOCK_BYTES = 4 << 20      # aim ~4 MiB of logits per grid step


def _vmem_budget():
    """Scoped VMEM limit to request, derived from the chip generation."""
    try:
        cap = int(getattr(pltpu.get_tpu_info(), "vmem_capacity_bytes", 64 << 20))
    except Exception:
        cap = 64 << 20
    if cap >= (100 << 20):          # 128 MiB-class chips (v5e / v6e)
        return 100 << 20
    # 64 MiB-class chips (v7x) or unknown -> stay well under physical
    return min(40 << 20, (cap * 5) // 8)


def _gdl_kernel(logits_ref, target_ref, score_ref,
                inter_acc, sump_acc, sumt_acc, *,
                one_hot_target, masked, s_total):
    s = pl.program_id(1)
    num_s = pl.num_programs(1)

    @pl.when(s == 0)
    def _():
        inter_acc[...] = jnp.zeros_like(inter_acc)
        sump_acc[...] = jnp.zeros_like(sump_acc)
        sumt_acc[...] = jnp.zeros_like(sumt_acc)

    x = logits_ref[0].astype(jnp.float32)          # (C, R, 128)
    C, R, L = x.shape

    # ---- channel softmax: channel is the outer axis -> element-wise VPU work ----
    m = jnp.max(x, axis=0)                         # (R, 128)
    e = jnp.exp(x - m[None, :, :])                 # (C, R, 128)  (EUP)
    sum_e = jnp.sum(e, axis=0)                     # (R, 128)     (VPU adds)
    inv = pl.reciprocal(sum_e, approx=True)        # EUP slot
    inv = inv * (2.0 - sum_e * inv)                # one Newton step -> ~f32 accuracy

    if one_hot_target:
        t = target_ref[0].astype(jnp.float32)      # (C, R, 128)
        if masked:
            # positional validity of the padded tail; (R,128)-sized work only
            row = jax.lax.broadcasted_iota(jnp.int32, (R, L), 0)
            lane = jax.lax.broadcasted_iota(jnp.int32, (R, L), 1)
            flat = (s * R + row) * L + lane
            inv = jnp.where(flat < s_total, inv, 0.0)
    else:
        labels = target_ref[0].astype(jnp.int32)   # (R, 128)
        if masked:
            # padded pixels carry label -1 -> zero their softmax contribution
            inv = jnp.where(labels >= 0, inv, 0.0)

    # ---- per-class partial sums (unrolled over C: no (C,R,128) iota / p temps) ----
    inter_rows, sump_rows, sumt_rows = [], [], []
    for c in range(C):
        p_c = e[c] * inv                                            # (R, 128)
        if one_hot_target:
            t_c = t[c]
        else:
            t_c = (labels == c).astype(jnp.float32)
        inter_rows.append(jnp.sum(p_c * t_c, axis=0, keepdims=True))   # (1, 128)
        sump_rows.append(jnp.sum(p_c, axis=0, keepdims=True))
        sumt_rows.append(jnp.sum(t_c, axis=0, keepdims=True))
    inter_acc[...] += jnp.concatenate(inter_rows, axis=0)           # (C, 128)
    sump_acc[...] += jnp.concatenate(sump_rows, axis=0)
    sumt_acc[...] += jnp.concatenate(sumt_rows, axis=0)

    @pl.when(s == num_s - 1)
    def _():
        intersect = jnp.sum(inter_acc[...], axis=1, keepdims=True)  # (C, 1)
        sum_p = jnp.sum(sump_acc[...], axis=1, keepdims=True)
        sum_t = jnp.sum(sumt_acc[...], axis=1, keepdims=True)
        # NOTE: absent classes get w = 1/EPS, matching the reference formulation.
        w = 1.0 / (sum_t * sum_t + EPS)
        numer = jnp.sum(w * intersect)
        denom = jnp.sum(w * (sum_p + sum_t))
        score = 2.0 * numer / (denom + EPS)
        score_ref[...] = jnp.broadcast_to(score, score_ref.shape).astype(
            score_ref.dtype)


def _gdl_scores(logits, target, *, one_hot_target, max_block_rows=None):
    """Per-sample GeneralizedDiceScore, shape (N,) float32."""
    N, C = int(logits.shape[0]), int(logits.shape[1])
    S = 1
    for d in logits.shape[2:]:
        S *= int(d)
    rows = pl.cdiv(S, _LANES)
    log_isz = jnp.dtype(logits.dtype).itemsize

    if one_hot_target:
        tgt = target.reshape(N, C, S)
        tgt_row_bytes = C * _LANES * jnp.dtype(tgt.dtype).itemsize
    else:
        lbl_dtype = jnp.int8 if C <= 127 else jnp.int32
        tgt = target.reshape(N, S).astype(lbl_dtype)
        tgt_row_bytes = _LANES * jnp.dtype(lbl_dtype).itemsize

    # ---- byte-budget-driven spatial tile, clamped by per-generation VMEM ----
    vmem_limit = _vmem_budget()
    stream_row = C * _LANES * log_isz + tgt_row_bytes   # streamed bytes per row
    temps_row = 3 * C * _LANES * 4                      # f32 in-kernel temporaries
    per_row_vmem = 2 * stream_row + temps_row           # 2x double-buffered streams
    budget = (vmem_limit * 7) // 10                     # headroom for the compiler
    max_rows_vmem = max(_ROW_ALIGN, budget // per_row_vmem)
    target_rows = max(_ROW_ALIGN, _TARGET_BLOCK_BYTES // (C * _LANES * log_isz))
    rt = min(target_rows, max_rows_vmem)
    if max_block_rows is not None:
        rt = min(rt, max(_ROW_ALIGN, int(max_block_rows)))
    if rt >= rows:
        rows_tile, num_s = rows, 1        # full-rows block (alignment-exempt)
    else:
        rows_tile = max(_ROW_ALIGN, (rt // _ROW_ALIGN) * _ROW_ALIGN)
        num_s = pl.cdiv(rows, rows_tile)
    rows_padded = num_s * rows_tile
    s_padded = rows_padded * _LANES
    masked = s_padded != S

    x = logits.reshape(N, C, S)
    if masked:
        pad = s_padded - S
        x = jnp.pad(x, ((0, 0), (0, 0), (0, pad)))
        if one_hot_target:
            tgt = jnp.pad(tgt, ((0, 0), (0, 0), (0, pad)))
        else:
            tgt = jnp.pad(tgt, ((0, 0), (0, pad)), constant_values=-1)

    x4 = x.reshape(N, C, rows_padded, _LANES)
    if one_hot_target:
        tgt_r = tgt.reshape(N, C, rows_padded, _LANES)
        tgt_spec = pl.BlockSpec((1, C, rows_tile, _LANES),
                                lambda n, s: (n, 0, s, 0))
    else:
        tgt_r = tgt.reshape(N, rows_padded, _LANES)
        tgt_spec = pl.BlockSpec((1, rows_tile, _LANES),
                                lambda n, s: (n, s, 0))

    scores = pl.pallas_call(
        functools.partial(_gdl_kernel, one_hot_target=one_hot_target,
                          masked=masked, s_total=S),
        out_shape=jax.ShapeDtypeStruct((N, 1, _LANES), jnp.float32),
        grid_spec=pltpu.PrefetchScalarGridSpec(
            num_scalar_prefetch=0,
            grid=(N, num_s),
            in_specs=[
                pl.BlockSpec((1, C, rows_tile, _LANES),
                             lambda n, s: (n, 0, s, 0)),
                tgt_spec,
            ],
            out_specs=pl.BlockSpec((1, 1, _LANES), lambda n, s: (n, 0, 0)),
            scratch_shapes=[
                pltpu.VMEM((C, _LANES), jnp.float32),   # intersect partials
                pltpu.VMEM((C, _LANES), jnp.float32),   # sum_p partials
                pltpu.VMEM((C, _LANES), jnp.float32),   # sum_t partials
            ],
        ),
        compiler_params=pltpu.CompilerParams(
            dimension_semantics=("parallel", "arbitrary"),
            vmem_limit_bytes=int(vmem_limit),
        ),
    )(x4, tgt_r)
    return scores[:, 0, 0]


def generalized_dice_loss_from_labels(logits, labels, *, max_block_rows=None):
    """logits: (N, C, ...) float; labels: (N, ...) integer class ids.

    Preferred entry point: target traffic is ~4C x smaller than the one-hot
    path (labels are streamed as int8 when C <= 127).
    """
    scores = _gdl_scores(logits, labels, one_hot_target=False,
                         max_block_rows=max_block_rows)
    return 1.0 - jnp.mean(scores)


def generalized_dice_loss(logits, target, *, max_block_rows=None):
    """Module-equivalent forward: logits (N,C,H,W), target mask (N,C,H,W).

    The target tensor (one-hot or soft) is fed straight to the kernel -- no
    argmax pre-pass, so it is read from HBM exactly once and all-zero / soft
    target rows keep the exact reference semantics.
    """
    scores = _gdl_scores(logits, target, one_hot_target=True,
                         max_block_rows=max_block_rows)
    return 1.0 - jnp.mean(scores)


def _reference(logits, target):
    # pure-JAX reference of the same math, for sanity checking
    N, C = logits.shape[0], logits.shape[1]
    x = logits.reshape(N, C, -1).astype(jnp.float32)
    t = target.reshape(N, C, -1).astype(jnp.float32)
    p = jax.nn.softmax(x, axis=1)
    intersect = jnp.sum(p * t, axis=2)
    sum_p = jnp.sum(p, axis=2)
    sum_t = jnp.sum(t, axis=2)
    w = 1.0 / (sum_t * sum_t + EPS)
    numer = jnp.sum(w * intersect, axis=1)
    denom = jnp.sum(w * (sum_p + sum_t), axis=1)
    score = 2.0 * numer / (denom + EPS)
    return 1.0 - jnp.mean(score)


if __name__ == "__main__":
    key = jax.random.PRNGKey(0)
    k1, k2, k3, k4, k5, k6, k7, k8 = jax.random.split(key, 8)

    # 1) spec-sized module path (one-hot target fed directly): 2x4x16x16
    N, C, H, W = 2, 4, 16, 16
    logits = jax.random.normal(k1, (N, C, H, W), dtype=jnp.float32)
    labels = jax.random.randint(k2, (N, H, W), 0, C)
    target = jax.nn.one_hot(labels, C, axis=1, dtype=jnp.float32)
    loss = jax.block_until_ready(generalized_dice_loss(logits, target))
    ref = _reference(logits, target)
    assert jnp.allclose(loss, ref, atol=1e-4, rtol=1e-4), (loss, ref)

    # 2) module path with spatial size not a multiple of 128 (padding mask)
    N2, C2, H2, W2 = 2, 4, 15, 15
    logits2 = jax.random.normal(k3, (N2, C2, H2, W2), dtype=jnp.float32)
    labels2 = jax.random.randint(k4, (N2, H2, W2), 0, C2)
    target2 = jax.nn.one_hot(labels2, C2, axis=1, dtype=jnp.float32)
    loss2 = jax.block_until_ready(generalized_dice_loss(logits2, target2))
    ref2 = _reference(logits2, target2)
    assert jnp.allclose(loss2, ref2, atol=1e-4, rtol=1e-4), (loss2, ref2)

    # 3) labels path (int8 labels) with multi-tile spatial accumulation + padding
    N3, C3, H3, W3 = 2, 4, 65, 128        # rows = 65 -> 3 tiles of 32 rows, padded
    logits3 = jax.random.normal(k5, (N3, C3, H3, W3), dtype=jnp.float32)
    labels3 = jax.random.randint(k6, (N3, H3, W3), 0, C3)
    target3 = jax.nn.one_hot(labels3, C3, axis=1, dtype=jnp.float32)
    loss3 = jax.block_until_ready(
        generalized_dice_loss_from_labels(logits3, labels3, max_block_rows=32))
    ref3 = _reference(logits3, target3)
    assert jnp.allclose(loss3, ref3, atol=1e-4, rtol=1e-4), (loss3, ref3)

    # 4) bf16 logits pass-through on the labels path
    N4, C4, H4, W4 = 2, 4, 16, 16
    logits4 = jax.random.normal(k7, (N4, C4, H4, W4), dtype=jnp.bfloat16)
    labels4 = jax.random.randint(k8, (N4, H4, W4), 0, C4)
    target4 = jax.nn.one_hot(labels4, C4, axis=1, dtype=jnp.float32)
    loss4 = jax.block_until_ready(
        generalized_dice_loss_from_labels(logits4, labels4))
    ref4 = _reference(logits4, target4)
    assert jnp.allclose(loss4, ref4, atol=5e-4, rtol=5e-4), (loss4, ref4)

    print("KERNEL_OK")
</pallas_src>

<mosaic_0001>
module attributes {stable_mosaic.version = 11 : i64} {
  func.func @_gdl_kernel(%arg0: i32, %arg1: i32, %arg2: memref<1x4x2x128xf32, #tpu.memory_space<vmem>>, %arg3: memref<1x4x2x128xf32, #tpu.memory_space<vmem>>, %arg4: memref<1x1x128xf32, #tpu.memory_space<vmem>>, %arg5: memref<4x128xf32, #tpu.memory_space<vmem>>, %arg6: memref<4x128xf32, #tpu.memory_space<vmem>>, %arg7: memref<4x128xf32, #tpu.memory_space<vmem>>) attributes {dimension_semantics = [#tpu.dimension_semantics<parallel>, #tpu.dimension_semantics<arbitrary>], iteration_bounds = array<i64: 2, 1>, scalar_prefetch = 0 : i64, scratch_operands = 3 : i64, tpu.core_type = #tpu.core_type<tc>, window_params = [{transform_indices = @transform_0, window_bounds = array<i64: 1, 4, 2, 128>}, {transform_indices = @transform_1, window_bounds = array<i64: 1, 4, 2, 128>}, {transform_indices = @transform_2, window_bounds = array<i64: 1, 1, 128>}]} {
    %c0_i32 = arith.constant 0 : i32
    %0 = arith.cmpi eq, %arg1, %c0_i32 : i32
    %1 = arith.extui %0 : i1 to i32
    %c0_i32_0 = arith.constant 0 : i32
    %2 = arith.cmpi ne, %1, %c0_i32_0 : i32
    scf.if %2 {
      %cst_36 = arith.constant 0.000000e+00 : f32
      %81 = vector.broadcast %cst_36 : f32 to vector<4x128xf32>
      %c0_37 = arith.constant 0 : index
      %c0_38 = arith.constant 0 : index
      %82 = vector.load %arg5[%c0_37, %c0_38] : memref<4x128xf32, #tpu.memory_space<vmem>>, vector<4x128xf32>
      tpu.vector_store %arg5[%c0_37, %c0_38], %81 {strides = array<i32>} : memref<4x128xf32, #tpu.memory_space<vmem>>, vector<4x128xf32>,
      %cst_39 = arith.constant 0.000000e+00 : f32
      %83 = vector.broadcast %cst_39 : f32 to vector<4x128xf32>
      %c0_40 = arith.constant 0 : index
      %c0_41 = arith.constant 0 : index
      %84 = vector.load %arg6[%c0_40, %c0_41] : memref<4x128xf32, #tpu.memory_space<vmem>>, vector<4x128xf32>
      tpu.vector_store %arg6[%c0_40, %c0_41], %83 {strides = array<i32>} : memref<4x128xf32, #tpu.memory_space<vmem>>, vector<4x128xf32>,
      %cst_42 = arith.constant 0.000000e+00 : f32
      %85 = vector.broadcast %cst_42 : f32 to vector<4x128xf32>
      %c0_43 = arith.constant 0 : index
      %c0_44 = arith.constant 0 : index
      %86 = vector.load %arg7[%c0_43, %c0_44] : memref<4x128xf32, #tpu.memory_space<vmem>>, vector<4x128xf32>
      tpu.vector_store %arg7[%c0_43, %c0_44], %85 {strides = array<i32>} : memref<4x128xf32, #tpu.memory_space<vmem>>, vector<4x128xf32>,
    } else {
    }
    %c0 = arith.constant 0 : index
    %c0_1 = arith.constant 0 : index
    %c0_2 = arith.constant 0 : index
    %c0_3 = arith.constant 0 : index
    %3 = vector.load %arg2[%c0, %c0_1, %c0_2, %c0_3] : memref<1x4x2x128xf32, #tpu.memory_space<vmem>>, vector<1x4x2x128xf32>
    %4 = vector.shape_cast %3 : vector<1x4x2x128xf32> to vector<4x2x128xf32>
    %cst = arith.constant dense<0xFF800000> : vector<2x128xf32>
    %5 = vector.multi_reduction <maximumf>, %4, %cst [0] : vector<4x2x128xf32> to vector<2x128xf32>
    %6 = vector.shape_cast %5 : vector<2x128xf32> to vector<1x2x128xf32>
    %7 = vector.broadcast %6 : vector<1x2x128xf32> to vector<4x2x128xf32>
    %8 = arith.subf %4, %7 : vector<4x2x128xf32>
    %9 = math.exp %8 : vector<4x2x128xf32>
    %cst_4 = arith.constant dense<0.000000e+00> : vector<2x128xf32>
    %10 = vector.multi_reduction <add>, %9, %cst_4 [0] : vector<4x2x128xf32> to vector<2x128xf32>
    %11 = tpu.reciprocal %10 {approx = true} : vector<2x128xf32> -> vector<2x128xf32>
    %12 = arith.mulf %10, %11 : vector<2x128xf32>
    %cst_5 = arith.constant 2.000000e+00 : f32
    %13 = vector.broadcast %cst_5 : f32 to vector<2x128xf32>
    %14 = arith.subf %13, %12 : vector<2x128xf32>
    %15 = arith.mulf %11, %14 : vector<2x128xf32>
    %c0_6 = arith.constant 0 : index
    %c0_7 = arith.constant 0 : index
    %c0_8 = arith.constant 0 : index
    %c0_9 = arith.constant 0 : index
    %16 = vector.load %arg3[%c0_6, %c0_7, %c0_8, %c0_9] : memref<1x4x2x128xf32, #tpu.memory_space<vmem>>, vector<1x4x2x128xf32>
    %17 = vector.shape_cast %16 : vector<1x4x2x128xf32> to vector<4x2x128xf32>
    %18 = vector.extract_strided_slice %9 {offsets = [0, 0, 0], sizes = [1, 2, 128], strides = [1, 1, 1]} : vector<4x2x128xf32> to vector<1x2x128xf32>
    %19 = vector.shape_cast %18 : vector<1x2x128xf32> to vector<2x128xf32>
    %20 = arith.mulf %19, %15 : vector<2x128xf32>
    %21 = vector.extract_strided_slice %17 {offsets = [0, 0, 0], sizes = [1, 2, 128], strides = [1, 1, 1]} : vector<4x2x128xf32> to vector<1x2x128xf32>
    %22 = vector.shape_cast %21 : vector<1x2x128xf32> to vector<2x128xf32>
    %23 = arith.mulf %20, %22 : vector<2x128xf32>
    %cst_10 = arith.constant dense<0.000000e+00> : vector<128xf32>
    %24 = vector.multi_reduction <add>, %23, %cst_10 [0] : vector<2x128xf32> to vector<128xf32>
    %25 = vector.shape_cast %24 : vector<128xf32> to vector<1x128xf32>
    %cst_11 = arith.constant dense<0.000000e+00> : vector<128xf32>
    %26 = vector.multi_reduction <add>, %20, %cst_11 [0] : vector<2x128xf32> to vector<128xf32>
    %27 = vector.shape_cast %26 : vector<128xf32> to vector<1x128xf32>
    %cst_12 = arith.constant dense<0.000000e+00> : vector<128xf32>
    %28 = vector.multi_reduction <add>, %22, %cst_12 [0] : vector<2x128xf32> to vector<128xf32>
    %29 = vector.shape_cast %28 : vector<128xf32> to vector<1x128xf32>
    %30 = vector.extract_strided_slice %9 {offsets = [1, 0, 0], sizes = [1, 2, 128], strides = [1, 1, 1]} : vector<4x2x128xf32> to vector<1x2x128xf32>
    %31 = vector.shape_cast %30 : vector<1x2x128xf32> to vector<2x128xf32>
    %32 = arith.mulf %31, %15 : vector<2x128xf32>
    %33 = vector.extract_strided_slice %17 {offsets = [1, 0, 0], sizes = [1, 2, 128], strides = [1, 1, 1]} : vector<4x2x128xf32> to vector<1x2x128xf32>
    %34 = vector.shape_cast %33 : vector<1x2x128xf32> to vector<2x128xf32>
    %35 = arith.mulf %32, %34 : vector<2x128xf32>
    %cst_13 = arith.constant dense<0.000000e+00> : vector<128xf32>
    %36 = vector.multi_reduction <add>, %35, %cst_13 [0] : vector<2x128xf32> to vector<128xf32>
    %37 = vector.shape_cast %36 : vector<128xf32> to vector<1x128xf32>
    %cst_14 = arith.constant dense<0.000000e+00> : vector<128xf32>
    %38 = vector.multi_reduction <add>, %32, %cst_14 [0] : vector<2x128xf32> to vector<128xf32>
    %39 = vector.shape_cast %38 : vector<128xf32> to vector<1x128xf32>
    %cst_15 = arith.constant dense<0.000000e+00> : vector<128xf32>
    %40 = vector.multi_reduction <add>, %34, %cst_15 [0] : vector<2x128xf32> to vector<128xf32>
    %41 = vector.shape_cast %40 : vector<128xf32> to vector<1x128xf32>
    %42 = vector.extract_strided_slice %9 {offsets = [2, 0, 0], sizes = [1, 2, 128], strides = [1, 1, 1]} : vector<4x2x128xf32> to vector<1x2x128xf32>
    %43 = vector.shape_cast %42 : vector<1x2x128xf32> to vector<2x128xf32>
    %44 = arith.mulf %43, %15 : vector<2x128xf32>
    %45 = vector.extract_strided_slice %17 {offsets = [2, 0, 0], sizes = [1, 2, 128], strides = [1, 1, 1]} : vector<4x2x128xf32> to vector<1x2x128xf32>
    %46 = vector.shape_cast %45 : vector<1x2x128xf32> to vector<2x128xf32>
    %47 = arith.mulf %44, %46 : vector<2x128xf32>
    %cst_16 = arith.constant dense<0.000000e+00> : vector<128xf32>
    %48 = vector.multi_reduction <add>, %47, %cst_16 [0] : vector<2x128xf32> to vector<128xf32>
    %49 = vector.shape_cast %48 : vector<128xf32> to vector<1x128xf32>
    %cst_17 = arith.constant dense<0.000000e+00> : vector<128xf32>
    %50 = vector.multi_reduction <add>, %44, %cst_17 [0] : vector<2x128xf32> to vector<128xf32>
    %51 = vector.shape_cast %50 : vector<128xf32> to vector<1x128xf32>
    %cst_18 = arith.constant dense<0.000000e+00> : vector<128xf32>
    %52 = vector.multi_reduction <add>, %46, %cst_18 [0] : vector<2x128xf32> to vector<128xf32>
    %53 = vector.shape_cast %52 : vector<128xf32> to vector<1x128xf32>
    %54 = vector.extract_strided_slice %9 {offsets = [3, 0, 0], sizes = [1, 2, 128], strides = [1, 1, 1]} : vector<4x2x128xf32> to vector<1x2x128xf32>
    %55 = vector.shape_cast %54 : vector<1x2x128xf32> to vector<2x128xf32>
    %56 = arith.mulf %55, %15 : vector<2x128xf32>
    %57 = vector.extract_strided_slice %17 {offsets = [3, 0, 0], sizes = [1, 2, 128], strides = [1, 1, 1]} : vector<4x2x128xf32> to vector<1x2x128xf32>
    %58 = vector.shape_cast %57 : vector<1x2x128xf32> to vector<2x128xf32>
    %59 = arith.mulf %56, %58 : vector<2x128xf32>
    %cst_19 = arith.constant dense<0.000000e+00> : vector<128xf32>
    %60 = vector.multi_reduction <add>, %59, %cst_19 [0] : vector<2x128xf32> to vector<128xf32>
    %61 = vector.shape_cast %60 : vector<128xf32> to vector<1x128xf32>
    %cst_20 = arith.constant dense<0.000000e+00> : vector<128xf32>
    %62 = vector.multi_reduction <add>, %56, %cst_20 [0] : vector<2x128xf32> to vector<128xf32>
    %63 = vector.shape_cast %62 : vector<128xf32> to vector<1x128xf32>
    %cst_21 = arith.constant dense<0.000000e+00> : vector<128xf32>
    %64 = vector.multi_reduction <add>, %58, %cst_21 [0] : vector<2x128xf32> to vector<128xf32>
    %65 = vector.shape_cast %64 : vector<128xf32> to vector<1x128xf32>
    %c0_22 = arith.constant 0 : index
    %c0_23 = arith.constant 0 : index
    %66 = vector.load %arg5[%c0_22, %c0_23] : memref<4x128xf32, #tpu.memory_space<vmem>>, vector<4x128xf32>
    %67 = tpu.concatenate %25, %37, %49, %61 in 0 : vector<1x128xf32>, vector<1x128xf32>, vector<1x128xf32>, vector<1x128xf32> -> vector<4x128xf32>
    %68 = arith.addf %66, %67 : vector<4x128xf32>
    %c0_24 = arith.constant 0 : index
    %c0_25 = arith.constant 0 : index
    %69 = vector.load %arg5[%c0_24, %c0_25] : memref<4x128xf32, #tpu.memory_space<vmem>>, vector<4x128xf32>
    tpu.vector_store %arg5[%c0_24, %c0_25], %68 {strides = array<i32>} : memref<4x128xf32, #tpu.memory_space<vmem>>, vector<4x128xf32>,
    %c0_26 = arith.constant 0 : index
    %c0_27 = arith.constant 0 : index
    %70 = vector.load %arg6[%c0_26, %c0_27] : memref<4x128xf32, #tpu.memory_space<vmem>>, vector<4x128xf32>
    %71 = tpu.concatenate %27, %39, %51, %63 in 0 : vector<1x128xf32>, vector<1x128xf32>, vector<1x128xf32>, vector<1x128xf32> -> vector<4x128xf32>
    %72 = arith.addf %70, %71 : vector<4x128xf32>
    %c0_28 = arith.constant 0 : index
    %c0_29 = arith.constant 0 : index
    %73 = vector.load %arg6[%c0_28, %c0_29] : memref<4x128xf32, #tpu.memory_space<vmem>>, vector<4x128xf32>
    tpu.vector_store %arg6[%c0_28, %c0_29], %72 {strides = array<i32>} : memref<4x128xf32, #tpu.memory_space<vmem>>, vector<4x128xf32>,
    %c0_30 = arith.constant 0 : index
    %c0_31 = arith.constant 0 : index
    %74 = vector.load %arg7[%c0_30, %c0_31] : memref<4x128xf32, #tpu.memory_space<vmem>>, vector<4x128xf32>
    %75 = tpu.concatenate %29, %41, %53, %65 in 0 : vector<1x128xf32>, vector<1x128xf32>, vector<1x128xf32>, vector<1x128xf32> -> vector<4x128xf32>
    %76 = arith.addf %74, %75 : vector<4x128xf32>
    %c0_32 = arith.constant 0 : index
    %c0_33 = arith.constant 0 : index
    %77 = vector.load %arg7[%c0_32, %c0_33] : memref<4x128xf32, #tpu.memory_space<vmem>>, vector<4x128xf32>
    tpu.vector_store %arg7[%c0_32, %c0_33], %76 {strides = array<i32>} : memref<4x128xf32, #tpu.memory_space<vmem>>, vector<4x128xf32>,
    %c0_i32_34 = arith.constant 0 : i32
    %78 = arith.cmpi eq, %arg1, %c0_i32_34 : i32
    %79 = arith.extui %78 : i1 to i32
    %c0_i32_35 = arith.constant 0 : i32
    %80 = arith.cmpi ne, %79, %c0_i32_35 : i32
    scf.if %80 {
      %c0_36 = arith.constant 0 : index
      %c0_37 = arith.constant 0 : index
      %81 = vector.load %arg5[%c0_36, %c0_37] : memref<4x128xf32, #tpu.memory_space<vmem>>, vector<4x128xf32>
      %cst_38 = arith.constant dense<0.000000e+00> : vector<4xf32>
      %82 = vector.multi_reduction <add>, %81, %cst_38 [1] : vector<4x128xf32> to vector<4xf32>
      %83 = vector.shape_cast %82 : vector<4xf32> to vector<4x1xf32>
      %c0_39 = arith.constant 0 : index
      %c0_40 = arith.constant 0 : index
      %84 = vector.load %arg6[%c0_39, %c0_40] : memref<4x128xf32, #tpu.memory_space<vmem>>, vector<4x128xf32>
      %cst_41 = arith.constant dense<0.000000e+00> : vector<4xf32>
      %85 = vector.multi_reduction <add>, %84, %cst_41 [1] : vector<4x128xf32> to vector<4xf32>
      %86 = vector.shape_cast %85 : vector<4xf32> to vector<4x1xf32>
      %c0_42 = arith.constant 0 : index
      %c0_43 = arith.constant 0 : index
      %87 = vector.load %arg7[%c0_42, %c0_43] : memref<4x128xf32, #tpu.memory_space<vmem>>, vector<4x128xf32>
      %cst_44 = arith.constant dense<0.000000e+00> : vector<4xf32>
      %88 = vector.multi_reduction <add>, %87, %cst_44 [1] : vector<4x128xf32> to vector<4xf32>
      %89 = vector.shape_cast %88 : vector<4xf32> to vector<4x1xf32>
      %90 = arith.mulf %89, %89 : vector<4x1xf32>
      %cst_45 = arith.constant 9.99999974E-6 : f32
      %91 = vector.broadcast %cst_45 : f32 to vector<4x1xf32>
      %92 = arith.addf %90, %91 : vector<4x1xf32>
      %cst_46 = arith.constant 1.000000e+00 : f32
      %93 = vector.broadcast %cst_46 : f32 to vector<4x1xf32>
      %94 = arith.divf %93, %92 : vector<4x1xf32>
      %95 = arith.mulf %94, %83 : vector<4x1xf32>
      %96 = vector.shape_cast %95 : vector<4x1xf32> to vector<1x4x1xf32>
      %cst_47 = arith.constant dense<0.000000e+00> : vector<1xf32>
      %97 = vector.multi_reduction <add>, %96, %cst_47 [1, 2] : vector<1x4x1xf32> to vector<1xf32>
      %98 = vector.shape_cast %97 : vector<1xf32> to vector<1x1x1xf32>
      %99 = vector.extract %98[0, 0, 0] : f32 from vector<1x1x1xf32>
      %100 = arith.addf %86, %89 : vector<4x1xf32>
      %101 = arith.mulf %94, %100 : vector<4x1xf32>
      %102 = vector.shape_cast %101 : vector<4x1xf32> to vector<1x4x1xf32>
      %cst_48 = arith.constant dense<0.000000e+00> : vector<1xf32>
      %103 = vector.multi_reduction <add>, %102, %cst_48 [1, 2] : vector<1x4x1xf32> to vector<1xf32>
      %104 = vector.shape_cast %103 : vector<1xf32> to vector<1x1x1xf32>
      %105 = vector.extract %104[0, 0, 0] : f32 from vector<1x1x1xf32>
      %cst_49 = arith.constant 2.000000e+00 : f32
      %106 = arith.mulf %cst_49, %99 : f32
      %cst_50 = arith.constant 9.99999974E-6 : f32
      %107 = arith.addf %105, %cst_50 : f32
      %108 = arith.divf %106, %107 : f32
      %109 = vector.broadcast %108 : f32 to vector<1x1x128xf32>
      %c0_51 = arith.constant 0 : index
      %c0_52 = arith.constant 0 : index
      %c0_53 = arith.constant 0 : index
      %110 = vector.load %arg4[%c0_51, %c0_52, %c0_53] : memref<1x1x128xf32, #tpu.memory_space<vmem>>, vector<1x1x128xf32>
      tpu.vector_store %arg4[%c0_51, %c0_52, %c0_53], %109 {strides = array<i32>} : memref<1x1x128xf32, #tpu.memory_space<vmem>>, vector<1x1x128xf32>,
    } else {
    }
    return
  }
  func.func @transform_0(%arg0: i32, %arg1: i32) -> (i32, i32, i32, i32) {
    %c0_i32 = arith.constant 0 : i32
    %c0_i32_0 = arith.constant 0 : i32
    %c0_i32_1 = arith.constant 0 : i32
    return %arg0, %c0_i32, %arg1, %c0_i32_0 : i32, i32, i32, i32
  }
  func.func @transform_1(%arg0: i32, %arg1: i32) -> (i32, i32, i32, i32) {
    %c0_i32 = arith.constant 0 : i32
    %c0_i32_0 = arith.constant 0 : i32
    %c0_i32_1 = arith.constant 0 : i32
    return %arg0, %c0_i32, %arg1, %c0_i32_0 : i32, i32, i32, i32
  }
  func.func @transform_2(%arg0: i32, %arg1: i32) -> (i32, i32, i32) {
    %c0_i32 = arith.constant 0 : i32
    %c0_i32_0 = arith.constant 0 : i32
    %c0_i32_1 = arith.constant 0 : i32
    return %arg0, %c0_i32, %c0_i32_0 : i32, i32, i32
  }
}

</mosaic_0001>

<llo_original>
// kernel: tpu_custom_call.1
$region0: #{tpu_custom_call.1}
  #allocation0 [shape = 'u32[]', space=smem, size = 0x4, offset = 0x4, fixed_abs, tag = 'smem constant byte address 0x4 - core index']
  #allocation1 [shape = 'u32[144,128]{1,0:T(1,128)}', space=vmem, size = 0x12000, scoped, tag = 'internal scratch']
  #allocation2 [shape = 'f32[4,128]{1,0:T(4,128)}', space=vmem, size = 0x800, scoped, tag = 'scratch operand']
  #allocation3 [shape = 'f32[4,128]{1,0:T(4,128)}', space=vmem, size = 0x800, scoped, tag = 'scratch operand']
  #allocation4 [shape = 'f32[4,128]{1,0:T(4,128)}', space=vmem, size = 0x800, scoped, tag = 'scratch operand']
  %s0 = inlined_call_operand.hbm [shape: f32[2,4,2,128], index: 0, kind: input, shape index: {}]
  %s1 = inlined_call_operand.hbm [shape: f32[2,4,2,128], index: 1, kind: input, shape index: {}]
  %s2 = inlined_call_operand.hbm [shape: f32[2,1,128], index: 2, kind: output, shape index: {}]
  %s3 = sld [smem:[#allocation0]]
  $region57: #{tpu_custom_call.1} parent=0
    _
  %s5 = ssub.s32 1, %s3
  %s6 = scalar_select 0, %s5, %s3
  $region1: #{tpu_custom_call.1} parent=0
    #allocation5 [shape = 'u8[8192]{0}', space=vmem, size = 0x2000, scoped, tag = 'input window, operand 0']
    #allocation6 [shape = 's32[2]{0}', space=sflag, size = 0x8, scoped, tag = 'scoped memory for tpu_custom_call.1']
    #allocation7 [shape = 's32[2]{0}', space=sflag, size = 0x8, scoped, tag = 'scoped memory for tpu_custom_call.1']
    #allocation8 [shape = 'u8[8192]{0}', space=vmem, size = 0x2000, scoped, tag = 'input window, operand 1']
    #allocation9 [shape = 's32[2]{0}', space=sflag, size = 0x8, scoped, tag = 'scoped memory for tpu_custom_call.1']
    #allocation10 [shape = 'u8[1024]{0}', space=vmem, size = 0x400, scoped, tag = 'output window, operand 0']
    %7 = vsyncpa [#allocation6], 0
    %s8 = scalar_lea.sflag [#allocation6], 1
    %9 = vsyncpa %s8, 0
    %10 = vsyncpa [#allocation9], 0
    %s11 = scalar_lea.sflag [#allocation9], 1
    %12 = vsyncpa %s11, 0
    %13 = vsyncpa [#allocation7], 0
    %s14 = scalar_lea.sflag [#allocation7], 1
    %15 = vsyncpa %s14, 0
    loop: start=0, step=1, limit=4
    $region2: #{tpu_custom_call.1} parent=1 // loop_pre_header
      _
    $region3: #{tpu_custom_call.1} parent=1 // loop_header
      %s17 = sphi 0, %s21
      %p18 = scmp.ge.s32.totalorder %s17, 4
      %s24 = sphi 0, %s36
      %s25 = sphi 0, %s32
      %s26 = sphi 0, %s24
      %s27 = sphi 0, %s25
      %s28 = sphi 0, %s26
      %s29 = sphi 0, %s27
      %s41 = sphi 0, %s43
      %s44 = sphi 0, %s41
      %s45 = sphi 0, %s44
      %s61 = sphi 0, %s45
      %s69 = sphi 0, %s71
      %s72 = sphi 0, %s69
      %s73 = sphi 0, %s72
      %s89 = sphi 0, %s73
      %s95 = sphi 0, %s97
      %s98 = sphi 0, %s95
      %s99 = sphi 0, %s98
      %s115 = sphi 0, %s99
    $region4: #{tpu_custom_call.1} parent=1 // loop_header_branch
      %20 = sbr.rel (%p18) target = $region8
    $region5: #{tpu_custom_call.1} parent=1 // loop_body
      %s22 = ssub.s32 %s17, 1
      %s23 = ssub.s32 %s17, 2
      %s30 = sadd.s32 1, %s25
      %p31 = scmp.ge.s32.totalorder %s30, 1
      %s32 = scalar_select %p31, 0, %s30
      %s33 = sadd.s32 1, %s24
      %s34 = scalar_select %p31, %s33, %s24
      %p35 = scmp.ge.s32.totalorder %s34, 2
      %s36 = scalar_select %p35, 0, %s34
      %s37 = ssub.s32 %s24, %s36
      %s38 = ssub.s32 %s25, %s32
      %s39 = sor.u32 %s37, %s38
      %p40 = scmp.eq.s32.totalorder %s39, 0
      %s42 = sadd.s32 %s41, 1
      %s43 = scalar_select %p40, %s41, %s42
      %p46 = pneg %p40
      %p47 = scmp.eq.s32.totalorder %s17, 1
      %p48 = por %p46, %p47
      %p49 = scmp.ne.s32.totalorder %s41, %s44
      %p50 = scmp.eq.s32.totalorder %s17, 0
      %p51 = por %p49, %p50
      %p52 = scmp.ne.s32.totalorder %s41, %s44
      %p53 = scmp.eq.s32.totalorder %s22, 1
      %p54 = por %p52, %p53
      %p55 = scmp.ne.s32.totalorder %s44, %s45
      %p56 = scmp.eq.s32.totalorder %s22, 0
      %p57 = por %p55, %p56
      %p58 = scmp.ne.s32.totalorder %s44, %s45
      %p59 = scmp.eq.s32.totalorder %s23, 1
      %p60 = por %p58, %p59
      %p62 = scmp.ne.s32.totalorder %s45, %s61
      %p63 = scmp.eq.s32.totalorder %s23, 0
      %p64 = por %p62, %p63
      %s65 = ssub.s32 %s24, %s36
      %s66 = ssub.s32 %s25, %s32
      %s67 = sor.u32 %s65, %s66
      %p68 = scmp.eq.s32.totalorder %s67, 0
      %s70 = sadd.s32 %s69, 1
      %s71 = scalar_select %p68, %s69, %s70
      %p74 = pneg %p68
      %p75 = scmp.eq.s32.totalorder %s17, 1
      %p76 = por %p74, %p75
      %p77 = scmp.ne.s32.totalorder %s69, %s72
      %p78 = scmp.eq.s32.totalorder %s17, 0
      %p79 = por %p77, %p78
      %p80 = scmp.ne.s32.totalorder %s69, %s72
      %p81 = scmp.eq.s32.totalorder %s22, 1
      %p82 = por %p80, %p81
      %p83 = scmp.ne.s32.totalorder %s72, %s73
      %p84 = scmp.eq.s32.totalorder %s22, 0
      %p85 = por %p83, %p84
      %p86 = scmp.ne.s32.totalorder %s72, %s73
      %p87 = scmp.eq.s32.totalorder %s23, 1
      %p88 = por %p86, %p87
      %p90 = scmp.ne.s32.totalorder %s73, %s89
      %p91 = scmp.eq.s32.totalorder %s23, 0
      %p92 = por %p90, %p91
      %s93 = ssub.s32 %s24, %s36
      %p94 = scmp.eq.s32.totalorder %s93, 0
      %s96 = sadd.s32 %s95, 1
      %s97 = scalar_select %p94, %s95, %s96
      %p100 = pneg %p94
      %p101 = scmp.eq.s32.totalorder %s17, 1
      %p102 = por %p100, %p101
      %p103 = scmp.ne.s32.totalorder %s95, %s98
      %p104 = scmp.eq.s32.totalorder %s17, 0
      %p105 = por %p103, %p104
      %p106 = scmp.ne.s32.totalorder %s95, %s98
      %p107 = scmp.eq.s32.totalorder %s22, 1
      %p108 = por %p106, %p107
      %p109 = scmp.ne.s32.totalorder %s98, %s99
      %p110 = scmp.eq.s32.totalorder %s22, 0
      %p111 = por %p109, %p110
      %p112 = scmp.ne.s32.totalorder %s98, %s99
      %p113 = scmp.eq.s32.totalorder %s23, 1
      %p114 = por %p112, %p113
      %p116 = scmp.ne.s32.totalorder %s99, %s115
      %p117 = scmp.eq.s32.totalorder %s23, 0
      %p118 = por %p116, %p117
      %p119 = scmp.le.s32.totalorder 1, %s17
      %p120 = scmp.lt.s32.totalorder %s17, 3
      %p121 = pnand %p119, %p120
      %p122 = pneg %p121
      // Predicated region
      $region9: #{tpu_custom_call.1} parent=5 // pred_check
        _
      $region10: #{tpu_custom_call.1} parent=5 // pred_check_branch
        %124 = sbr.rel (%p121) target = $region12
      $region11: #{tpu_custom_call.1} parent=5 // pred_region
        %s125 = ssub.s32 %s17, 1
      $region12: #{tpu_custom_call.1} parent=5 // pred_fallthru
        _
      %p126 = scmp.lt.s32.totalorder %s17, 2
      // Predicated region
      $region13: #{tpu_custom_call.1} parent=5 // pred_check
        %p127 = pneg %p126
      $region14: #{tpu_custom_call.1} parent=5 // pred_check_branch
        %129 = sbr.rel (%p127) target = $region16
      $region15: #{tpu_custom_call.1} parent=5 // pred_region
        // Predicated region
        $region17: #{tpu_custom_call.1} parent=15 // pred_check
          %p130 = pneg %p51
        $region18: #{tpu_custom_call.1} parent=15 // pred_check_branch
          %132 = sbr.rel (%p130) target = $region20
        $region19: #{tpu_custom_call.1} parent=15 // pred_region
          %s133 = sand.u32 %s41, 1
          %s134 = scalar_lea.sflag [#allocation6], %s133
          %s135 = sand.u32 %s41, 1
          %s136 = smul.addr %s135, 8
          %s137 = scalar_lea.vmem [#allocation5], %s136
          %s139 = ssub.s32 128, 128
          %140 = vsyncadd %s134, %s139
          %s141 = smul.addr %s24, 4
          %s142 = sadd.s32 %s25, %s141
          %s143 = smul.addr %s142, 32
          %s144 = scalar_lea.hbm %s0, %s143
          %s145 = sshll.u32 %s137, 4
          %s146 = int_to_ptr.vmem [resolvable:$true] %s145
          %151 = dma.hbm_to_vmem [thread:$0]  %s144, 128, %s146, %s134, 32, 32, 2
        $region20: #{tpu_custom_call.1} parent=15 // pred_fallthru
          _
        // Predicated region
        $region21: #{tpu_custom_call.1} parent=15 // pred_check
          %p152 = pneg %p79
        $region22: #{tpu_custom_call.1} parent=15 // pred_check_branch
          %154 = sbr.rel (%p152) target = $region24
        $region23: #{tpu_custom_call.1} parent=15 // pred_region
          %s155 = sand.u32 %s69, 1
          %s156 = scalar_lea.sflag [#allocation9], %s155
          %s157 = sand.u32 %s69, 1
          %s158 = smul.addr %s157, 8
          %s159 = scalar_lea.vmem [#allocation8], %s158
          %s161 = ssub.s32 128, 128
          %162 = vsyncadd %s156, %s161
          %s163 = smul.addr %s24, 4
          %s164 = sadd.s32 %s25, %s163
          %s165 = smul.addr %s164, 32
          %s166 = scalar_lea.hbm %s1, %s165
          %s167 = sshll.u32 %s159, 4
          %s168 = int_to_ptr.vmem [resolvable:$true] %s167
          %173 = dma.hbm_to_vmem [thread:$0]  %s166, 128, %s168, %s156, 32, 32, 2
        $region24: #{tpu_custom_call.1} parent=15 // pred_fallthru
          _
      $region16: #{tpu_custom_call.1} parent=5 // pred_fallthru
        _
      %p174 = scmp.le.s32.totalorder 1, %s17
      %p175 = scmp.lt.s32.totalorder %s17, 3
      %p176 = pnand %p174, %p175
      %p177 = pneg %p176
      // Predicated region
      $region25: #{tpu_custom_call.1} parent=5 // pred_check
        _
      $region26: #{tpu_custom_call.1} parent=5 // pred_check_branch
        %179 = sbr.rel (%p176) target = $region28
      $region27: #{tpu_custom_call.1} parent=5 // pred_region
        %s180 = ssub.s32 %s17, 1
        %s181 = sand.u32 %s44, 1
        %s182 = scalar_lea.sflag [#allocation6], %s181
        %s183 = sand.u32 %s44, 1
        %s184 = smul.addr %s183, 8
        %s185 = scalar_lea.vmem [#allocation5], %s184
        // Predicated region
        $region29: #{tpu_custom_call.1} parent=27 // pred_check
          %p186 = pneg %p57
        $region30: #{tpu_custom_call.1} parent=27 // pred_check_branch
          %188 = sbr.rel (%p186) target = $region32
        $region31: #{tpu_custom_call.1} parent=27 // pred_region
          %189 = dma.done %s182, 128
        $region32: #{tpu_custom_call.1} parent=27 // pred_fallthru
          _
        %s190 = sand.u32 %s72, 1
        %s191 = scalar_lea.sflag [#allocation9], %s190
        %s192 = sand.u32 %s72, 1
        %s193 = smul.addr %s192, 8
        %s194 = scalar_lea.vmem [#allocation8], %s193
        // Predicated region
        $region33: #{tpu_custom_call.1} parent=27 // pred_check
          %p195 = pneg %p85
        $region34: #{tpu_custom_call.1} parent=27 // pred_check_branch
          %197 = sbr.rel (%p195) target = $region36
        $region35: #{tpu_custom_call.1} parent=27 // pred_region
          %198 = dma.done %s191, 128
        $region36: #{tpu_custom_call.1} parent=27 // pred_fallthru
          _
        %s199 = sand.u32 %s44, 1
        %s200 = scalar_lea.sflag [#allocation6], %s199
        %s201 = sand.u32 %s44, 1
        %s202 = smul.addr %s201, 8
        %s203 = scalar_lea.vmem [#allocation5], %s202
        %p204 = pneg %p57
        %p205 = pneg %p54
        %s206 = sand.u32 %s72, 1
        %s207 = scalar_lea.sflag [#allocation9], %s206
        %s208 = sand.u32 %s72, 1
        %s209 = smul.addr %s208, 8
        %s210 = scalar_lea.vmem [#allocation8], %s209
        %p211 = pneg %p85
        %p212 = pneg %p82
        %p213 = pneg %p111
        %p214 = pneg %p108
        %s215 = sand.u32 %s98, 1
        %s216 = scalar_lea.sflag [#allocation7], %s215
        %s217 = sand.u32 %s98, 1
        %s218 = scalar_lea.vmem [#allocation10], %s217
        %p219 = scmp.eq.s32.totalorder %s27, 0
        // Predicated region
        $region37: #{tpu_custom_call.1} parent=27 // pred_check
          %p220 = pneg %p219
        $region38: #{tpu_custom_call.1} parent=27 // pred_check_branch
          %222 = sbr.rel (%p220) target = $region40
        $region39: #{tpu_custom_call.1} parent=27 // pred_region
          %223 = vst [vmem:[#allocation2] sm:$0xf] 0.0
          %224 = vst [vmem:[#allocation3] sm:$0xf] 0.0
          %225 = vst [vmem:[#allocation4] sm:$0xf] 0.0
        $region40: #{tpu_custom_call.1} parent=27 // pred_fallthru
          _
        %v226 = vld [vmem:[%s185] sm:$0x3]
        %v227 = vld [vmem:[%s185 + $0x2] sm:$0x3]
        %v228 = vld [vmem:[%s185 + $0x4] sm:$0x3]
        %v229 = vld [vmem:[%s185 + $0x6] sm:$0x3]
        %vm230 = vcmask 1041408
        %v231 = vsel %vm230, %v226, -inf
        %v232 = vsel %vm230, %v227, -inf
        %v233 = vsel %vm230, %v228, -inf
        %v234 = vsel %vm230, %v229, -inf
        %v235 = vmax.f32 %v231, %v232
        %v236 = vmax.f32 %v233, %v234
        %v237 = vmax.f32 %v235, %v236
        %v238 = vsub.f32 %v226, %v237
        %v239 = vsub.f32 %v227, %v237
        %v240 = vsub.f32 %v228, %v237
        %v241 = vsub.f32 %v229, %v237
        %v242 = vmul.f32 %v238, 1.442695
        %v243 = vpow.pop %v242
        %v244 = vmul.f32 %v239, 1.442695
        %v245 = vpow.pop %v244
        %v246 = vmul.f32 %v240, 1.442695
        %v247 = vpow.pop %v246
        %v248 = vmul.f32 %v241, 1.442695
        %v249 = vpow.pop %v248
        %v250 = vsel %vm230, %v243, 0.0
        %v251 = vsel %vm230, %v245, 0.0
        %v252 = vadd.f32 %v250, %v251
        %v253 = vsel %vm230, %v247, 0.0
        %v254 = vadd.f32 %v252, %v253
        %v255 = vsel %vm230, %v249, 0.0
        %v256 = vadd.f32 %v254, %v255
        %v257 = vrcp.pop %v256
        %v258 = vmul.f32 %v256, %v257
        %v259 = vsub.f32 2.0, %v258
        %v260 = vmul.f32 %v257, %v259
        %v261 = vld [vmem:[%s194] sm:$0x3]
        %v262 = vld [vmem:[%s194 + $0x2] sm:$0x3]
        %v263 = vld [vmem:[%s194 + $0x4] sm:$0x3]
        %v264 = vld [vmem:[%s194 + $0x6] sm:$0x3]
        %v265 = vmul.f32 %v243, %v260
        %v266 = vmul.f32 %v265, %v261
        %v267 = vsel %vm230, %v266, 0.0
        %v268 = vrot.slane %v267, 4
        %v269 = vadd.f32 %v267, %v268
        %v270 = vrot.slane %v269, 2
        %v271 = vadd.f32 %v269, %v270
        %v272 = vrot.slane %v271, 1
        %v273 = vadd.f32 %v271, %v272
        %v274 = vsel %vm230, %v265, 0.0
        %v275 = vrot.slane %v274, 4
        %v276 = vadd.f32 %v274, %v275
        %v277 = vrot.slane %v276, 2
        %v278 = vadd.f32 %v276, %v277
        %v279 = vrot.slane %v278, 1
        %v280 = vadd.f32 %v278, %v279
        %v281 = vsel %vm230, %v261, 0.0
        %v282 = vrot.slane %v281, 4
        %v283 = vadd.f32 %v281, %v282
        %v284 = vrot.slane %v283, 2
        %v285 = vadd.f32 %v283, %v284
        %v286 = vrot.slane %v285, 1
        %v287 = vadd.f32 %v285, %v286
        %v288 = vmul.f32 %v245, %v260
        %v289 = vmul.f32 %v288, %v262
        %v290 = vsel %vm230, %v289, 0.0
        %v291 = vrot.slane %v290, 4
        %v292 = vadd.f32 %v290, %v291
        %v293 = vrot.slane %v292, 2
        %v294 = vadd.f32 %v292, %v293
        %v295 = vrot.slane %v294, 1
        %v296 = vadd.f32 %v294, %v295
        %v297 = vsel %vm230, %v288, 0.0
        %v298 = vrot.slane %v297, 4
        %v299 = vadd.f32 %v297, %v298
        %v300 = vrot.slane %v299, 2
        %v301 = vadd.f32 %v299, %v300
        %v302 = vrot.slane %v301, 1
        %v303 = vadd.f32 %v301, %v302
        %v304 = vsel %vm230, %v262, 0.0
        %v305 = vrot.slane %v304, 4
        %v306 = vadd.f32 %v304, %v305
        %v307 = vrot.slane %v306, 2
        %v308 = vadd.f32 %v306, %v307
        %v309 = vrot.slane %v308, 1
        %v310 = vadd.f32 %v308, %v309
        %v311 = vmul.f32 %v247, %v260
        %v312 = vmul.f32 %v311, %v263
        %v313 = vsel %vm230, %v312, 0.0
        %v314 = vrot.slane %v313, 4
        %v315 = vadd.f32 %v313, %v314
        %v316 = vrot.slane %v315, 2
        %v317 = vadd.f32 %v315, %v316
        %v318 = vrot.slane %v317, 1
        %v319 = vadd.f32 %v317, %v318
        %v320 = vsel %vm230, %v311, 0.0
        %v321 = vrot.slane %v320, 4
        %v322 = vadd.f32 %v320, %v321
        %v323 = vrot.slane %v322, 2
        %v324 = vadd.f32 %v322, %v323
        %v325 = vrot.slane %v324, 1
        %v326 = vadd.f32 %v324, %v325
        %v327 = vsel %vm230, %v263, 0.0
        %v328 = vrot.slane %v327, 4
        %v329 = vadd.f32 %v327, %v328
        %v330 = vrot.slane %v329, 2
        %v331 = vadd.f32 %v329, %v330
        %v332 = vrot.slane %v331, 1
        %v333 = vadd.f32 %v331, %v332
        %v334 = vmul.f32 %v249, %v260
        %v335 = vmul.f32 %v334, %v264
        %v336 = vsel %vm230, %v335, 0.0
        %v337 = vrot.slane %v336, 4
        %v338 = vadd.f32 %v336, %v337
        %v339 = vrot.slane %v338, 2
        %v340 = vadd.f32 %v338, %v339
        %v341 = vrot.slane %v340, 1
        %v342 = vadd.f32 %v340, %v341
        %v343 = vsel %vm230, %v334, 0.0
        %v344 = vrot.slane %v343, 4
        %v345 = vadd.f32 %v343, %v344
        %v346 = vrot.slane %v345, 2
        %v347 = vadd.f32 %v345, %v346
        %v348 = vrot.slane %v347, 1
        %v349 = vadd.f32 %v347, %v348
        %v350 = vsel %vm230, %v264, 0.0
        %v351 = vrot.slane %v350, 4
        %v352 = vadd.f32 %v350, %v351
        %v353 = vrot.slane %v352, 2
        %v354 = vadd.f32 %v352, %v353
        %v355 = vrot.slane %v354, 1
        %v356 = vadd.f32 %v354, %v355
        %v357 = vld [vmem:[#allocation2] sm:$0xf]
        %vm358 = vcmask 1040384
        %v359 = vsel %vm358, %v273, %v296
        %v360 = vsel %vm230, %v359, %v319
        %vm361 = vcmask 1042432
        %v362 = vsel %vm361, %v360, %v342
        %v363 = vadd.f32 %v357, %v362
        %364 = vst [vmem:[#allocation2] sm:$0xf] %v363
        %v365 = vld [vmem:[#allocation3] sm:$0xf]
        %v366 = vsel %vm358, %v280, %v303
        %v367 = vsel %vm230, %v366, %v326
        %v368 = vsel %vm361, %v367, %v349
        %v369 = vadd.f32 %v365, %v368
        %370 = vst [vmem:[#allocation3] sm:$0xf] %v369
        %v371 = vld [vmem:[#allocation4] sm:$0xf]
        %v372 = vsel %vm358, %v287, %v310
        %v373 = vsel %vm230, %v372, %v333
        %v374 = vsel %vm361, %v373, %v356
        %v375 = vadd.f32 %v371, %v374
        %376 = vst [vmem:[#allocation4] sm:$0xf] %v375
        // Predicated region
        $region41: #{tpu_custom_call.1} parent=27 // pred_check
          %p377 = pneg %p219
        $region42: #{tpu_custom_call.1} parent=27 // pred_check_branch
          %379 = sbr.rel (%p377) target = $region44
        $region43: #{tpu_custom_call.1} parent=27 // pred_region
          %v380 = vld [vmem:[#allocation2] sm:$0xf]
          %vm381 = vcmask 1043456
          %v382 = vsel %vm381, %v380, 0.0
          %383 = vadd.xlane.f32.xlu0 %v382
          %v384 = vpop.xlane.xlu0 %383
          %v385 = vld [vmem:[#allocation3] sm:$0xf]
          %v386 = vsel %vm381, %v385, 0.0
          %387 = vadd.xlane.f32.xlu0 %v386
          %v388 = vpop.xlane.xlu0 %387
          %v389 = vld [vmem:[#allocation4] sm:$0xf]
          %v390 = vsel %vm381, %v389, 0.0
          %391 = vadd.xlane.f32.xlu0 %v390
          %v392 = vpop.xlane.xlu0 %391
          %v393 = vmul.f32 %v392, %v392
          %v394 = vadd.f32 %v393, 1e-05
          %v395 = vrcp.pop %v394
          %v396 = vmul.f32 1.0, %v395
          %v397 = vmul.f32 %v396, %v384
          %vm398 = vcmask 3072
          %v399 = vsel %vm398, %v397, 0.0
          %400 = vadd.xlane.f32.xlu0 %v399
          %v401 = vpop.xlane.xlu0 %400
          %v402 = vrot.slane %v401, 4
          %v403 = vadd.f32 %v401, %v402
          %v404 = vrot.slane %v403, 2
          %v405 = vadd.f32 %v403, %v404
          %v406 = vrot.slane %v405, 1
          %v407 = vadd.f32 %v405, %v406
          %s408 = vtos %v407
          %v409 = vadd.f32 %v388, %v392
          %v410 = vmul.f32 %v396, %v409
          %v411 = vsel %vm398, %v410, 0.0
          %412 = vadd.xlane.f32.xlu0 %v411
          %v413 = vpop.xlane.xlu0 %412
          %v414 = vrot.slane %v413, 4
          %v415 = vadd.f32 %v413, %v414
          %v416 = vrot.slane %v415, 2
          %v417 = vadd.f32 %v415, %v416
          %v418 = vrot.slane %v417, 1
          %v419 = vadd.f32 %v417, %v418
          %s420 = vtos %v419
          %s421 = smul.f32 %s408, 2.0
          %s422 = sadd.f32 %s420, 1e-05
          %v423 = vstv %s422
          %v424 = vrcp.pop %v423
          %s425 = vtos %v424
          %s426 = smul.f32 %s421, %s425
          %v427 = vstv %s426
          %428 = vst [vmem:[%s218] sm:$0x1] %v427
        $region44: #{tpu_custom_call.1} parent=27 // pred_fallthru
          _
        %s429 = sand.u32 %s98, 1
        %s430 = scalar_lea.sflag [#allocation7], %s429
        %s431 = sand.u32 %s98, 1
        %s432 = scalar_lea.vmem [#allocation10], %s431
        // Predicated region
        $region45: #{tpu_custom_call.1} parent=27 // pred_check
          %p433 = pneg %p108
        $region46: #{tpu_custom_call.1} parent=27 // pred_check_branch
          %435 = sbr.rel (%p433) target = $region48
        $region47: #{tpu_custom_call.1} parent=27 // pred_region
          %s437 = ssub.s32 16, 16
          %438 = vsyncadd %s430, %s437
          %s439 = smul.addr %s26, 16
          %s440 = scalar_lea.hbm %s2, %s439
          %s442 = sshll.u32 %s432, 4
          %s443 = int_to_ptr.vmem [resolvable:$true] %s442
          %445 = dma.vmem_to_hbm [thread:$0]  %s443, 16, %s440, %s430
        $region48: #{tpu_custom_call.1} parent=27 // pred_fallthru
          _
      $region28: #{tpu_custom_call.1} parent=5 // pred_fallthru
        _
      %p446 = scmp.le.s32.totalorder 2, %s17
      // Predicated region
      $region49: #{tpu_custom_call.1} parent=5 // pred_check
        %p447 = pneg %p446
      $region50: #{tpu_custom_call.1} parent=5 // pred_check_branch
        %449 = sbr.rel (%p447) target = $region52
      $region51: #{tpu_custom_call.1} parent=5 // pred_region
        %s450 = ssub.s32 %s17, 2
        // Predicated region
        $region53: #{tpu_custom_call.1} parent=51 // pred_check
          %p451 = pneg %p114
        $region54: #{tpu_custom_call.1} parent=51 // pred_check_branch
          %453 = sbr.rel (%p451) target = $region56
        $region55: #{tpu_custom_call.1} parent=51 // pred_region
          %s454 = sand.u32 %s99, 1
          %s455 = scalar_lea.sflag [#allocation7], %s454
          %s456 = sand.u32 %s99, 1
          %s457 = scalar_lea.vmem [#allocation10], %s456
          %458 = dma.done %s455, 16
        $region56: #{tpu_custom_call.1} parent=51 // pred_fallthru
          _
      $region52: #{tpu_custom_call.1} parent=5 // pred_fallthru
        _
    $region6: #{tpu_custom_call.1} parent=1 // loop_footer
      %s21 = sadd.s32 1, %s17
    $region7: #{tpu_custom_call.1} parent=1 // loop_footer_branch
      %16 = sbr.rel target = $region3
    $region8: #{tpu_custom_call.1} parent=1 // loop_exit
      _
    %459 = vsyncpa [#allocation6], 1
    %s460 = scalar_lea.sflag [#allocation6], 1
    %461 = vsyncpa %s460, 1
    %462 = vsyncpa [#allocation9], 1
    %s463 = scalar_lea.sflag [#allocation9], 1
    %464 = vsyncpa %s463, 1
    %465 = vsyncpa [#allocation7], 1
    %s466 = scalar_lea.sflag [#allocation7], 1
    %467 = vsyncpa %s466, 1

</llo_original>
